<compile_context>
chip_gen: v7x
topology: tpu7x:2x2x1
jax: 0.10.0
libtpu: 0.0.40
codegen_flags: <defaults>
</compile_context>

<pallas_src>
import math

import jax
import jax.numpy as jnp
from jax.experimental import pallas as pl
from jax.experimental.pallas import tpu as pltpu


def _round_up(x, m):
    return ((x + m - 1) // m) * m


# ---------------------------------------------------------------------------
# Hardware queries (best effort; every fallback is correctness-safe).
# ---------------------------------------------------------------------------
def _vmem_capacity_bytes():
    try:
        info = pltpu.get_tpu_info()
        cap = getattr(info, "vmem_capacity_bytes", None)
        if cap and int(cap) >= (32 << 20):
            return int(cap)
    except Exception:
        pass
    try:
        kind = jax.devices()[0].device_kind.lower()
        if "v7" in kind or "7x" in kind:
            return 64 * 1024 * 1024
        return 128 * 1024 * 1024
    except Exception:
        return 64 * 1024 * 1024  # conservative: valid on every generation


def _tensorcores_per_chip():
    """Best-effort TensorCores/chip (v4 / v5p / v7x = 2; v5e / v6e = 1)."""
    try:
        kind = jax.devices()[0].device_kind.lower()
    except Exception:
        return 1
    if "lite" in kind or "v5e" in kind or "v6e" in kind:
        return 1
    for tag in ("v7", "7x", "v4", "v5p", "v5"):
        if tag in kind:
            return 2
    return 1


# ---------------------------------------------------------------------------
# Fused GCN kernel (single-TensorCore chips):
#   out[i-block] = adj[i-block, :] @ (x @ W) + bias
# `support` lives in a bf16 VMEM scratch computed once at grid step 0 and
# reused by every later row-block step (grid axis therefore "arbitrary").
# ---------------------------------------------------------------------------
def _gcn_fused_kernel_bias(x_ref, w_ref, adj_ref, bias_ref, o_ref, support_ref):
    @pl.when(pl.program_id(0) == 0)
    def _():
        support_ref[...] = jnp.dot(
            x_ref[...], w_ref[...], preferred_element_type=jnp.float32
        ).astype(support_ref.dtype)

    out = jnp.dot(
        adj_ref[...].astype(jnp.bfloat16),
        support_ref[...],
        preferred_element_type=jnp.float32,
    )
    o_ref[...] = (out + bias_ref[...]).astype(o_ref.dtype)


def _gcn_fused_kernel_nobias(x_ref, w_ref, adj_ref, o_ref, support_ref):
    @pl.when(pl.program_id(0) == 0)
    def _():
        support_ref[...] = jnp.dot(
            x_ref[...], w_ref[...], preferred_element_type=jnp.float32
        ).astype(support_ref.dtype)

    out = jnp.dot(
        adj_ref[...].astype(jnp.bfloat16),
        support_ref[...],
        preferred_element_type=jnp.float32,
    )
    o_ref[...] = out.astype(o_ref.dtype)


def gcn_forward_fused(x, adj, weight, bias=None, *, block_rows=256,
                      vmem_limit_bytes=None):
    """Single-pallas_call GCN forward: x, W and support stay resident in VMEM."""
    n, f_in = x.shape
    f_out = weight.shape[1]
    f_out_p = _round_up(f_out, 128)  # lane-dense support scratch / output blocks
    if f_out_p != f_out:
        weight = jnp.pad(weight, ((0, 0), (0, f_out_p - f_out)))
        if bias is not None:
            bias = jnp.pad(bias, ((0, 0), (0, f_out_p - f_out)))
    add_bias = bias is not None

    tm = min(block_rows, _round_up(n, 8))  # sublane-aligned row block
    n_pad = _round_up(n, tm)
    if n_pad != n:
        # Padded adjacency rows only produce extra output rows; sliced off below.
        adj = jnp.pad(adj, ((0, n_pad - n), (0, 0)))
    grid = (n_pad // tm,)

    in_specs = [
        pl.BlockSpec((n, f_in), lambda i: (0, 0)),        # x : resident
        pl.BlockSpec((f_in, f_out_p), lambda i: (0, 0)),  # W : resident
        pl.BlockSpec((tm, n), lambda i: (i, 0)),          # adj row block streamed
    ]
    args = [x, weight, adj]
    if add_bias:
        in_specs.append(pl.BlockSpec((1, f_out_p), lambda i: (0, 0)))
        args.append(bias)
        kernel = _gcn_fused_kernel_bias
    else:
        kernel = _gcn_fused_kernel_nobias

    out = pl.pallas_call(
        kernel,
        out_shape=jax.ShapeDtypeStruct((n_pad, f_out_p), jnp.float32),
        grid_spec=pltpu.PrefetchScalarGridSpec(
            num_scalar_prefetch=0,
            grid=grid,
            in_specs=in_specs,
            out_specs=pl.BlockSpec((tm, f_out_p), lambda i: (i, 0)),
            scratch_shapes=[pltpu.VMEM((n, f_out_p), jnp.bfloat16)],
        ),
        compiler_params=pltpu.CompilerParams(
            # Must stay sequential: the support scratch written at step 0 is
            # reused by every later row-block step.
            dimension_semantics=("arbitrary",),
            vmem_limit_bytes=vmem_limit_bytes,
        ),
    )(*args)
    if (n_pad, f_out_p) != (n, f_out):
        out = out[:n, :f_out]
    return out


# ---------------------------------------------------------------------------
# Split path (multi-TensorCore chips): projection kernel + parallel aggregation.
# ---------------------------------------------------------------------------
def _project_kernel(x_ref, w_ref, o_ref):
    o_ref[...] = jnp.dot(
        x_ref[...], w_ref[...], preferred_element_type=jnp.float32
    ).astype(o_ref.dtype)


def gcn_project(x, weight, *, out_dtype=jnp.bfloat16, vmem_limit_bytes=None):
    """support = x @ W as a tiny single-step kernel (everything resident)."""
    n, f_in = x.shape
    f_out = weight.shape[1]
    f_out_p = _round_up(f_out, 128)
    if f_out_p != f_out:
        weight = jnp.pad(weight, ((0, 0), (0, f_out_p - f_out)))

    out = pl.pallas_call(
        _project_kernel,
        out_shape=jax.ShapeDtypeStruct((n, f_out_p), out_dtype),
        grid_spec=pltpu.PrefetchScalarGridSpec(
            num_scalar_prefetch=0,
            grid=(1,),
            in_specs=[pl.BlockSpec((n, f_in), lambda i: (0, 0)),
                      pl.BlockSpec((f_in, f_out_p), lambda i: (0, 0))],
            out_specs=pl.BlockSpec((n, f_out_p), lambda i: (0, 0)),
        ),
        compiler_params=pltpu.CompilerParams(
            dimension_semantics=("arbitrary",),
            vmem_limit_bytes=vmem_limit_bytes,
        ),
    )(x, weight)
    return out[:, :f_out] if f_out_p != f_out else out


def _gcn_agg_kernel_bias(adj_ref, support_ref, bias_ref, o_ref):
    out = jnp.dot(
        adj_ref[...].astype(jnp.bfloat16),
        support_ref[...].astype(jnp.bfloat16),
        preferred_element_type=jnp.float32,
    )
    o_ref[...] = (out + bias_ref[...]).astype(o_ref.dtype)


def _gcn_agg_kernel_nobias(adj_ref, support_ref, o_ref):
    out = jnp.dot(
        adj_ref[...].astype(jnp.bfloat16),
        support_ref[...].astype(jnp.bfloat16),
        preferred_element_type=jnp.float32,
    )
    o_ref[...] = out.astype(o_ref.dtype)


def gcn_aggregate(adj, support, bias=None, *, block_rows=256,
                  vmem_limit_bytes=None):
    """output = adj @ support (+ bias) with `support` resident in VMEM.

    Every grid step is independent, so the row-block axis is "parallel" and
    shards across TensorCores on multi-core chips (v7x / v4 / v5p).
    """
    n_rows, n_cols = adj.shape
    f_out = support.shape[1]
    f_out_p = _round_up(f_out, 128)
    if f_out_p != f_out:
        support = jnp.pad(support, ((0, 0), (0, f_out_p - f_out)))
        if bias is not None:
            bias = jnp.pad(bias, ((0, 0), (0, f_out_p - f_out)))
    add_bias = bias is not None

    tm = min(block_rows, _round_up(n_rows, 8))
    m_pad = _round_up(n_rows, tm)
    if m_pad != n_rows:
        adj = jnp.pad(adj, ((0, m_pad - n_rows), (0, 0)))
    grid = (m_pad // tm,)

    in_specs = [
        pl.BlockSpec((tm, n_cols), lambda i: (i, 0)),       # adj row block streamed
        pl.BlockSpec((n_cols, f_out_p), lambda i: (0, 0)),  # support resident
    ]
    args = [adj, support]
    if add_bias:
        in_specs.append(pl.BlockSpec((1, f_out_p), lambda i: (0, 0)))
        args.append(bias)
        kernel = _gcn_agg_kernel_bias
    else:
        kernel = _gcn_agg_kernel_nobias

    out = pl.pallas_call(
        kernel,
        out_shape=jax.ShapeDtypeStruct((m_pad, f_out_p), jnp.float32),
        grid_spec=pltpu.PrefetchScalarGridSpec(
            num_scalar_prefetch=0,
            grid=grid,
            in_specs=in_specs,
            out_specs=pl.BlockSpec((tm, f_out_p), lambda i: (i, 0)),
        ),
        compiler_params=pltpu.CompilerParams(
            dimension_semantics=("parallel",),
            vmem_limit_bytes=vmem_limit_bytes,
        ),
    )(*args)
    if (m_pad, f_out_p) != (n_rows, f_out):
        out = out[:n_rows, :f_out]
    return out


# ---------------------------------------------------------------------------
# Fallback: tiled matmul (+ optional fused bias) for graphs whose `support`
# does not fit in VMEM.  Accumulates directly into the resident output block;
# the bias initializes the block at k==0 (no extra final pass).
# ---------------------------------------------------------------------------
def _mm_kernel_bias(a_ref, b_ref, bias_ref, o_ref):
    @pl.when(pl.program_id(2) == 0)
    def _():
        o_ref[...] = jnp.broadcast_to(bias_ref[...], o_ref.shape).astype(o_ref.dtype)

    o_ref[...] += jnp.dot(a_ref[...], b_ref[...], preferred_element_type=jnp.float32)


def _mm_kernel(a_ref, b_ref, o_ref):
    @pl.when(pl.program_id(2) == 0)
    def _():
        o_ref[...] = jnp.zeros_like(o_ref)

    o_ref[...] += jnp.dot(a_ref[...], b_ref[...], preferred_element_type=jnp.float32)


def matmul_bias(a, b, bias=None, *, tm=256, tn=512, tk=512, vmem_limit_bytes=None):
    """Computes a @ b (+ bias); pads to tile multiples so no rows/cols drop."""
    m, k = a.shape
    k2, n = b.shape
    assert k == k2
    add_bias = bias is not None

    tm = min(tm, _round_up(m, 8))      # multiple of 8 (sublane)
    tk = min(tk, _round_up(k, 128))    # multiple of 128 (lane)
    tn = min(tn, _round_up(n, 128))    # multiple of 128 (lane)
    m_pad, k_pad, n_pad = _round_up(m, tm), _round_up(k, tk), _round_up(n, tn)

    if (m_pad, k_pad) != (m, k):
        a = jnp.pad(a, ((0, m_pad - m), (0, k_pad - k)))
    if (k_pad, n_pad) != (k, n):
        b = jnp.pad(b, ((0, k_pad - k), (0, n_pad - n)))

    grid = (m_pad // tm, n_pad // tn, k_pad // tk)

    in_specs = [
        pl.BlockSpec((tm, tk), lambda i, j, kk: (i, kk)),
        pl.BlockSpec((tk, tn), lambda i, j, kk: (kk, j)),
    ]
    args = [a, b]
    if add_bias:
        if n_pad != n:
            bias = jnp.pad(bias, ((0, 0), (0, n_pad - n)))
        in_specs.append(pl.BlockSpec((1, tn), lambda i, j, kk: (0, j)))
        args.append(bias)
        kernel = _mm_kernel_bias
    else:
        kernel = _mm_kernel

    out = pl.pallas_call(
        kernel,
        out_shape=jax.ShapeDtypeStruct((m_pad, n_pad), jnp.float32),
        grid_spec=pltpu.PrefetchScalarGridSpec(
            num_scalar_prefetch=0,
            grid=grid,
            in_specs=in_specs,
            out_specs=pl.BlockSpec((tm, tn), lambda i, j, kk: (i, j)),
        ),
        compiler_params=pltpu.CompilerParams(
            dimension_semantics=("parallel", "parallel", "arbitrary"),
            vmem_limit_bytes=vmem_limit_bytes,
        ),
    )(*args)
    return out[:m, :n] if (m_pad, n_pad) != (m, n) else out


# ---------------------------------------------------------------------------
# GraphConvolution module (inference semantics; dropout = identity).
# ---------------------------------------------------------------------------
class GraphConvolutionPallas:
    def __init__(self, in_features, out_features, bias=True, key=None):
        self.in_features = in_features
        self.out_features = out_features
        stdv = 1.0 / math.sqrt(out_features)
        if key is None:
            key = jax.random.PRNGKey(0)
        kw, kb = jax.random.split(key)
        # matches nn.init.uniform_(-stdv, stdv)
        self.weight = jax.random.uniform(
            kw, (in_features, out_features), jnp.float32, -stdv, stdv
        )
        self.bias = (
            jax.random.uniform(kb, (1, out_features), jnp.float32, -stdv, stdv)
            if bias
            else None
        )
        # Hardware-aware VMEM budget (96 MiB usable on v5e/v6e, 48 MiB on v7x).
        self._vmem_cap = _vmem_capacity_bytes()
        self._budget = int(self._vmem_cap * 0.75)
        self._cores = _tensorcores_per_chip()

    # -- sizing helpers -----------------------------------------------------
    def _block_rows(self, n):
        # v5e/v6e (128 MiB VMEM): bigger row blocks amortize per-step overhead;
        # v7x (64 MiB): smaller blocks keep the streamed adj buffers in budget.
        tm = 512 if self._vmem_cap >= (96 << 20) else 256
        tm = min(tm, _round_up(n, 8))
        # Double-buffered bf16 adj row block must stay within ~1/3 of budget.
        while tm > 8 and 2 * tm * n * 2 > self._budget // 3:
            tm //= 2
        return max(_round_up(tm, 8), 8)

    def _gcn_vmem_bytes(self, n, tm):
        """Counts 2 pipeline buffers per BlockSpec input/output + margin."""
        f_in = self.in_features
        f_out = _round_up(self.out_features, 128)
        resident = 2 * 4 * (n * f_in + f_in * f_out + f_out)   # x, W, bias (f32)
        support = 2 * 2 * n * f_out                            # bf16 support/scratch
        streamed = 2 * 2 * tm * n + 2 * 4 * tm * f_out         # bf16 adj + f32 out
        return resident + support + streamed + (2 << 20)       # Mosaic internals

    def _vmem_limit(self, needed):
        hi = int(self._vmem_cap * 0.9)
        return max(min(needed + (8 << 20), hi), min(32 << 20, hi))

    # -- forward ------------------------------------------------------------
    def __call__(self, x, adj):
        n = x.shape[0]
        x = x.astype(jnp.float32)
        # bf16 adjacency stream: halves adj HBM/VMEM bytes and hits the MXU's
        # native bf16 path; accumulation stays f32.  Row-normalized adjacency
        # values are numerically safe in bf16.
        adj = adj.astype(jnp.bfloat16)

        tm = self._block_rows(n)
        needed = self._gcn_vmem_bytes(n, tm)
        if needed <= self._budget:
            limit = self._vmem_limit(needed)
            if self._cores > 1:
                # Multi-TC chips: separate projection so the row-block axis is
                # "parallel" and shards across TensorCores.
                support = gcn_project(x, self.weight, vmem_limit_bytes=limit)
                return gcn_aggregate(adj, support, self.bias,
                                     block_rows=tm, vmem_limit_bytes=limit)
            # Single-TC chips: fully fused, support never round-trips HBM.
            return gcn_forward_fused(x, adj, self.weight, self.bias,
                                     block_rows=tm, vmem_limit_bytes=limit)

        # Large-graph fallback: two tiled matmuls (support round-trips HBM once).
        limit = min(int(self._vmem_cap * 0.5), 64 << 20)
        f_in, f_out = self.in_features, self.out_features
        support = matmul_bias(
            x, self.weight,
            tm=256, tn=min(_round_up(f_out, 128), 1024),
            tk=min(_round_up(f_in, 128), 1024),
            vmem_limit_bytes=limit)
        support = support.astype(jnp.bfloat16)
        # tn covers f_out (up to cap) so the huge adjacency is streamed once;
        # large tk cuts grid-step count and accumulation passes.
        return matmul_bias(
            adj, support, bias=self.bias,
            tm=256, tn=min(_round_up(f_out, 128), 1024),
            tk=min(_round_up(n, 128), 1024),
            vmem_limit_bytes=limit)


# ---------------------------------------------------------------------------
if __name__ == "__main__":
    key = jax.random.PRNGKey(0)
    k_x, k_adj, k_params, k_a, k_b, k_bias = jax.random.split(key, 6)

    N = 256      # number of graph nodes
    IN_F = 128   # in_features
    OUT_F = 128  # out_features

    x = jax.random.normal(k_x, (N, IN_F), dtype=jnp.float32)

    # Deterministic "sparse-ish" dense adjacency (row-normalized random mask).
    raw = jax.random.uniform(k_adj, (N, N), dtype=jnp.float32)
    mask = (raw > 0.9).astype(jnp.float32) + jnp.eye(N, dtype=jnp.float32)
    deg = jnp.maximum(mask.sum(axis=1, keepdims=True), 1.0)
    adj = mask / deg

    layer = GraphConvolutionPallas(IN_F, OUT_F, bias=True, key=k_params)

    # f32 reference.
    ref = jnp.matmul(
        adj,
        jnp.matmul(x, layer.weight, precision=jax.lax.Precision.HIGHEST),
        precision=jax.lax.Precision.HIGHEST,
    ) + layer.bias

    # bf16 adjacency/support streaming => tolerance looser than pure f32.
    TOL = dict(atol=3e-2, rtol=3e-2)

    # 1) Module path (fused on 1-TC chips, split/parallel on multi-TC chips).
    out = jax.block_until_ready(layer(x, adj))
    assert out.shape == (N, OUT_F)
    assert jnp.allclose(out, ref, **TOL)

    adj_bf16 = adj.astype(jnp.bfloat16)

    # 2) Fused single-call path with a multi-step row grid (v5e/v6e structure).
    out_f = jax.block_until_ready(
        gcn_forward_fused(x, adj_bf16, layer.weight, layer.bias, block_rows=64))
    assert out_f.shape == (N, OUT_F)
    assert jnp.allclose(out_f, ref, **TOL)

    # 3) Split projection + parallel aggregation path (v7x / megacore structure).
    support = gcn_project(x, layer.weight)
    out_s = jax.block_until_ready(
        gcn_aggregate(adj_bf16, support, layer.bias, block_rows=64))
    assert out_s.shape == (N, OUT_F)
    assert jnp.allclose(out_s, ref, **TOL)

    # 4) Padded tiled-matmul fallback on non-tile-multiple shapes.
    a = jax.random.normal(k_a, (200, 96), dtype=jnp.float32)
    b = jax.random.normal(k_b, (96, 72), dtype=jnp.float32)
    bias2 = jax.random.uniform(k_bias, (1, 72), dtype=jnp.float32)
    out2 = jax.block_until_ready(matmul_bias(a, b, bias=bias2))
    ref2 = jnp.matmul(a, b, precision=jax.lax.Precision.HIGHEST) + bias2
    assert out2.shape == (200, 72)
    assert jnp.allclose(out2, ref2, atol=1e-2, rtol=1e-2)

    print("KERNEL_OK")
</pallas_src>

<mosaic_0001>
module attributes {stable_mosaic.version = 11 : i64} {
  func.func @_gcn_fused_kernel_bias(%arg0: i32, %arg1: memref<256x128xf32, #tpu.memory_space<vmem>>, %arg2: memref<128x128xf32, #tpu.memory_space<vmem>>, %arg3: memref<256x256xbf16, #tpu.memory_space<vmem>>, %arg4: memref<1x128xf32, #tpu.memory_space<vmem>>, %arg5: memref<256x128xf32, #tpu.memory_space<vmem>>, %arg6: memref<256x128xbf16, #tpu.memory_space<vmem>>) attributes {dimension_semantics = [#tpu.dimension_semantics<arbitrary>], iteration_bounds = array<i64: 1>, scalar_prefetch = 0 : i64, scratch_operands = 1 : i64, tpu.core_type = #tpu.core_type<tc>, window_params = [{pipeline_mode = #tpu.pipeline_mode<synchronous>, transform_indices = @transform_0, window_bounds = array<i64: 256, 128>}, {pipeline_mode = #tpu.pipeline_mode<synchronous>, transform_indices = @transform_1, window_bounds = array<i64: 128, 128>}, {transform_indices = @transform_2, window_bounds = array<i64: 256, 256>}, {pipeline_mode = #tpu.pipeline_mode<synchronous>, transform_indices = @transform_3, window_bounds = array<i64: 1, 128>}, {transform_indices = @transform_4, window_bounds = array<i64: 256, 128>}]} {
    %c0_i32 = arith.constant 0 : i32
    %0 = arith.cmpi eq, %arg0, %c0_i32 : i32
    %1 = arith.extui %0 : i1 to i32
    %c0_i32_0 = arith.constant 0 : i32
    %2 = arith.cmpi ne, %1, %c0_i32_0 : i32
    scf.if %2 {
      %c0_8 = arith.constant 0 : index
      %c0_9 = arith.constant 0 : index
      %10 = vector.load %arg1[%c0_8, %c0_9] : memref<256x128xf32, #tpu.memory_space<vmem>>, vector<256x128xf32>
      %c0_10 = arith.constant 0 : index
      %c0_11 = arith.constant 0 : index
      %11 = vector.load %arg2[%c0_10, %c0_11] : memref<128x128xf32, #tpu.memory_space<vmem>>, vector<128x128xf32>
      %cst_12 = arith.constant dense<0.000000e+00> : vector<256x128xf32>
      %12 = tpu.matmul %10, %11, %cst_12 {dimension_numbers = #tpu.dot_dimension_numbers<[1], [0], [0], [1], [0, 0, 1, 1], [], []>} : vector<256x128xf32>, vector<128x128xf32>, vector<256x128xf32> -> vector<256x128xf32>
      %13 = arith.truncf %12 : vector<256x128xf32> to vector<256x128xbf16>
      %c0_13 = arith.constant 0 : index
      %c0_14 = arith.constant 0 : index
      %14 = vector.load %arg6[%c0_13, %c0_14] : memref<256x128xbf16, #tpu.memory_space<vmem>>, vector<256x128xbf16>
      tpu.vector_store %arg6[%c0_13, %c0_14], %13 {strides = array<i32>} : memref<256x128xbf16, #tpu.memory_space<vmem>>, vector<256x128xbf16>,
    } else {
    }
    %c0 = arith.constant 0 : index
    %c0_1 = arith.constant 0 : index
    %3 = vector.load %arg3[%c0, %c0_1] : memref<256x256xbf16, #tpu.memory_space<vmem>>, vector<256x256xbf16>
    %c0_2 = arith.constant 0 : index
    %c0_3 = arith.constant 0 : index
    %4 = vector.load %arg6[%c0_2, %c0_3] : memref<256x128xbf16, #tpu.memory_space<vmem>>, vector<256x128xbf16>
    %cst = arith.constant dense<0.000000e+00> : vector<256x128xf32>
    %5 = tpu.matmul %3, %4, %cst {dimension_numbers = #tpu.dot_dimension_numbers<[1], [0], [0], [1], [0, 0, 1, 1], [], []>} : vector<256x256xbf16>, vector<256x128xbf16>, vector<256x128xf32> -> vector<256x128xf32>
    %c0_4 = arith.constant 0 : index
    %c0_5 = arith.constant 0 : index
    %6 = vector.load %arg4[%c0_4, %c0_5] : memref<1x128xf32, #tpu.memory_space<vmem>>, vector<1x128xf32>
    %7 = vector.broadcast %6 : vector<1x128xf32> to vector<256x128xf32>
    %8 = arith.addf %5, %7 : vector<256x128xf32>
    %c0_6 = arith.constant 0 : index
    %c0_7 = arith.constant 0 : index
    %9 = vector.load %arg5[%c0_6, %c0_7] : memref<256x128xf32, #tpu.memory_space<vmem>>, vector<256x128xf32>
    tpu.vector_store %arg5[%c0_6, %c0_7], %8 {strides = array<i32>} : memref<256x128xf32, #tpu.memory_space<vmem>>, vector<256x128xf32>,
    return
  }
  func.func @transform_0(%arg0: i32) -> (i32, i32) {
    %c0_i32 = arith.constant 0 : i32
    %c0_i32_0 = arith.constant 0 : i32
    %c0_i32_1 = arith.constant 0 : i32
    return %c0_i32, %c0_i32_0 : i32, i32
  }
  func.func @transform_1(%arg0: i32) -> (i32, i32) {
    %c0_i32 = arith.constant 0 : i32
    %c0_i32_0 = arith.constant 0 : i32
    %c0_i32_1 = arith.constant 0 : i32
    return %c0_i32, %c0_i32_0 : i32, i32
  }
  func.func @transform_2(%arg0: i32) -> (i32, i32) {
    %c0_i32 = arith.constant 0 : i32
    %c0_i32_0 = arith.constant 0 : i32
    return %arg0, %c0_i32 : i32, i32
  }
  func.func @transform_3(%arg0: i32) -> (i32, i32) {
    %c0_i32 = arith.constant 0 : i32
    %c0_i32_0 = arith.constant 0 : i32
    %c0_i32_1 = arith.constant 0 : i32
    return %c0_i32, %c0_i32_0 : i32, i32
  }
  func.func @transform_4(%arg0: i32) -> (i32, i32) {
    %c0_i32 = arith.constant 0 : i32
    %c0_i32_0 = arith.constant 0 : i32
    return %arg0, %c0_i32 : i32, i32
  }
}

</mosaic_0001>

<llo_original>
// kernel: tpu_custom_call.1
$region0: #{tpu_custom_call.1}
  #allocation0 [shape = 'u32[]', space=smem, size = 0x4, offset = 0x4, fixed_abs, tag = 'smem constant byte address 0x4 - core index']
  #allocation1 [shape = 'u32[144,128]{1,0:T(1,128)}', space=vmem, size = 0x12000, scoped, tag = 'internal scratch']
  #allocation2 [shape = 'bf16[256,128]{1,0:T(16,128)(2,1)}', space=vmem, size = 0x10000, scoped, tag = 'scratch operand']
  %s0 = inlined_call_operand.hbm [shape: f32[256,128], index: 0, kind: input, shape index: {}]
  %s1 = inlined_call_operand.hbm [shape: f32[128,128], index: 1, kind: input, shape index: {}]
  %s2 = inlined_call_operand.hbm [shape: bf16[256,256], index: 2, kind: input, shape index: {}]
  %s3 = inlined_call_operand.vmem [shape: f32[1,128], index: 3, kind: input, shape index: {}]
  %s4 = inlined_call_operand.hbm [shape: f32[256,128], index: 4, kind: output, shape index: {}]
  %s5 = sld [smem:[#allocation0]]
  $region42: #{tpu_custom_call.1} parent=0
    _
  %s7 = ssub.s32 1, %s5
  %s8 = scalar_select 0, %s7, %s5
  $region1: #{tpu_custom_call.1} parent=0
    #allocation3 [shape = 'u8[131072]{0}', space=vmem, size = 0x20000, scoped, tag = 'input window, operand 0, single buffered']
    #allocation4 [shape = 's32[1]{0}', space=sflag, size = 0x4, scoped, tag = 'scoped memory for tpu_custom_call.1']
    #allocation5 [shape = 's32[1]{0}', space=sflag, size = 0x4, scoped, tag = 'scoped memory for tpu_custom_call.1']
    #allocation6 [shape = 'u8[65536]{0}', space=vmem, size = 0x10000, scoped, tag = 'input window, operand 1, single buffered']
    #allocation7 [shape = 's32[1]{0}', space=sflag, size = 0x4, scoped, tag = 'scoped memory for tpu_custom_call.1']
    #allocation8 [shape = 'u8[131072]{0}', space=vmem, size = 0x20000, scoped, tag = 'input window, operand 2, single buffered']
    #allocation9 [shape = 'u8[131072]{0}', space=vmem, size = 0x20000, scoped, tag = 'output window, operand 0, single buffered']
    %9 = vsyncpa [#allocation4], 0
    %10 = vsyncpa [#allocation7], 0
    %11 = vsyncpa [#allocation5], 0
    // Predicated region
    $region2: #{tpu_custom_call.1} parent=1 // pred_check
      _
    $region3: #{tpu_custom_call.1} parent=1 // pred_check_branch
      %13 = sbr.rel (0) target = $region5
    $region4: #{tpu_custom_call.1} parent=1 // pred_region
      %s15 = ssub.s32 4096, 4096
      %16 = vsyncadd [#allocation4], %s15
      %s17 = sshll.u32 [#allocation3], 4
      %s18 = int_to_ptr.vmem [resolvable:$true] %s17
      %23 = dma.hbm_to_vmem [thread:$0]  %s0, 4096, %s18, [#allocation4], 128, 128, 8
    $region5: #{tpu_custom_call.1} parent=1 // pred_fallthru
      _
    // Predicated region
    $region6: #{tpu_custom_call.1} parent=1 // pred_check
      _
    $region7: #{tpu_custom_call.1} parent=1 // pred_check_branch
      %25 = sbr.rel (0) target = $region9
    $region8: #{tpu_custom_call.1} parent=1 // pred_region
      %s27 = ssub.s32 2048, 2048
      %28 = vsyncadd [#allocation7], %s27
      %s29 = sshll.u32 [#allocation6], 4
      %s30 = int_to_ptr.vmem [resolvable:$true] %s29
      %35 = dma.hbm_to_vmem [thread:$0]  %s1, 2048, %s30, [#allocation7], 128, 128, 8
    $region9: #{tpu_custom_call.1} parent=1 // pred_fallthru
      _
    // Predicated region
    $region10: #{tpu_custom_call.1} parent=1 // pred_check
      _
    $region11: #{tpu_custom_call.1} parent=1 // pred_check_branch
      %37 = sbr.rel (0) target = $region13
    $region12: #{tpu_custom_call.1} parent=1 // pred_region
      %s39 = ssub.s32 4096, 4096
      %40 = vsyncadd [#allocation7], %s39
      %s41 = sshll.u32 [#allocation8], 4
      %s42 = int_to_ptr.vmem [resolvable:$true] %s41
      %47 = dma.hbm_to_vmem [thread:$0]  %s2, 4096, %s42, [#allocation7], 128, 128, 8
    $region13: #{tpu_custom_call.1} parent=1 // pred_fallthru
      _
    // Predicated region
    $region14: #{tpu_custom_call.1} parent=1 // pred_check
      _
    $region15: #{tpu_custom_call.1} parent=1 // pred_check_branch
      %49 = sbr.rel (0) target = $region17
    $region16: #{tpu_custom_call.1} parent=1 // pred_region
      _
    $region17: #{tpu_custom_call.1} parent=1 // pred_fallthru
      _
    // Predicated region
    $region18: #{tpu_custom_call.1} parent=1 // pred_check
      _
    $region19: #{tpu_custom_call.1} parent=1 // pred_check_branch
      %51 = sbr.rel (0) target = $region21
    $region20: #{tpu_custom_call.1} parent=1 // pred_region
      %52 = dma.done [#allocation4], 4096
    $region21: #{tpu_custom_call.1} parent=1 // pred_fallthru
      _
    // Predicated region
    $region22: #{tpu_custom_call.1} parent=1 // pred_check
      _
    $region23: #{tpu_custom_call.1} parent=1 // pred_check_branch
      %54 = sbr.rel (0) target = $region25
    $region24: #{tpu_custom_call.1} parent=1 // pred_region
      %55 = dma.done [#allocation7], 2048
    $region25: #{tpu_custom_call.1} parent=1 // pred_fallthru
      _
    // Predicated region
    $region26: #{tpu_custom_call.1} parent=1 // pred_check
      _
    $region27: #{tpu_custom_call.1} parent=1 // pred_check_branch
      %57 = sbr.rel (0) target = $region29
    $region28: #{tpu_custom_call.1} parent=1 // pred_region
      %58 = dma.done [#allocation7], 4096
    $region29: #{tpu_custom_call.1} parent=1 // pred_fallthru
      _
    %p60 = scmp.eq.s32.totalorder 0, 0
    // Predicated region
    $region30: #{tpu_custom_call.1} parent=1 // pred_check
      %p61 = pneg %p60
    $region31: #{tpu_custom_call.1} parent=1 // pred_check_branch
      %63 = sbr.rel (%p61) target = $region33
    $region32: #{tpu_custom_call.1} parent=1 // pred_region
      %v64 = vld [vmem:[#allocation3] sm:$0xff]
      %v65 = vld [vmem:[#allocation3 + $0x8] sm:$0xff]
      %v66 = vld [vmem:[#allocation3 + $0x10] sm:$0xff]
      %v67 = vld [vmem:[#allocation3 + $0x18] sm:$0xff]
      %v68 = vld [vmem:[#allocation3 + $0x20] sm:$0xff]
      %v69 = vld [vmem:[#allocation3 + $0x28] sm:$0xff]
      %v70 = vld [vmem:[#allocation3 + $0x30] sm:$0xff]
      %v71 = vld [vmem:[#allocation3 + $0x38] sm:$0xff]
      %v72 = vld [vmem:[#allocation3 + $0x40] sm:$0xff]
      %v73 = vld [vmem:[#allocation3 + $0x48] sm:$0xff]
      %v74 = vld [vmem:[#allocation3 + $0x50] sm:$0xff]
      %v75 = vld [vmem:[#allocation3 + $0x58] sm:$0xff]
      %v76 = vld [vmem:[#allocation3 + $0x60] sm:$0xff]
      %v77 = vld [vmem:[#allocation3 + $0x68] sm:$0xff]
      %v78 = vld [vmem:[#allocation3 + $0x70] sm:$0xff]
      %v79 = vld [vmem:[#allocation3 + $0x78] sm:$0xff]
      %v80 = vld [vmem:[#allocation3 + $0x80] sm:$0xff]
      %v81 = vld [vmem:[#allocation3 + $0x88] sm:$0xff]
      %v82 = vld [vmem:[#allocation3 + $0x90] sm:$0xff]
      %v83 = vld [vmem:[#allocation3 + $0x98] sm:$0xff]
      %v84 = vld [vmem:[#allocation3 + $0xa0] sm:$0xff]
      %v85 = vld [vmem:[#allocation3 + $0xa8] sm:$0xff]
      %v86 = vld [vmem:[#allocation3 + $0xb0] sm:$0xff]
      %v87 = vld [vmem:[#allocation3 + $0xb8] sm:$0xff]
      %v88 = vld [vmem:[#allocation3 + $0xc0] sm:$0xff]
      %v89 = vld [vmem:[#allocation3 + $0xc8] sm:$0xff]
      %v90 = vld [vmem:[#allocation3 + $0xd0] sm:$0xff]
      %v91 = vld [vmem:[#allocation3 + $0xd8] sm:$0xff]
      %v92 = vld [vmem:[#allocation3 + $0xe0] sm:$0xff]
      %v93 = vld [vmem:[#allocation3 + $0xe8] sm:$0xff]
      %v94 = vld [vmem:[#allocation3 + $0xf0] sm:$0xff]
      %v95 = vld [vmem:[#allocation3 + $0xf8] sm:$0xff]
      %v96 = vld [vmem:[#allocation6] sm:$0xff]
      %v97 = vld [vmem:[#allocation6 + $0x8] sm:$0xff]
      %v98 = vld [vmem:[#allocation6 + $0x10] sm:$0xff]
      %v99 = vld [vmem:[#allocation6 + $0x18] sm:$0xff]
      %v100 = vld [vmem:[#allocation6 + $0x20] sm:$0xff]
      %v101 = vld [vmem:[#allocation6 + $0x28] sm:$0xff]
      %v102 = vld [vmem:[#allocation6 + $0x30] sm:$0xff]
      %v103 = vld [vmem:[#allocation6 + $0x38] sm:$0xff]
      %v104 = vld [vmem:[#allocation6 + $0x40] sm:$0xff]
      %v105 = vld [vmem:[#allocation6 + $0x48] sm:$0xff]
      %v106 = vld [vmem:[#allocation6 + $0x50] sm:$0xff]
      %v107 = vld [vmem:[#allocation6 + $0x58] sm:$0xff]
      %v108 = vld [vmem:[#allocation6 + $0x60] sm:$0xff]
      %v109 = vld [vmem:[#allocation6 + $0x68] sm:$0xff]
      %v110 = vld [vmem:[#allocation6 + $0x70] sm:$0xff]
      %v111 = vld [vmem:[#allocation6 + $0x78] sm:$0xff]
      %112 = vmatprep.subr.mxu0 0.0
      %113 = vmatpush1.msra.mxu0 %v96
      %114 = vmatprep.subr.mxu0 0.0
      %115 = vmatpush1.msra.mxu0 %v97
      %116 = vmatprep.subr.mxu0 0.0
      %117 = vmatpush1.msra.mxu0 %v98
      %118 = vmatprep.subr.mxu0 0.0
      %119 = vmatpush1.msra.mxu0 %v99
      %120 = vmatprep.subr.mxu0 0.0
      %121 = vmatpush1.msra.mxu0 %v100
      %122 = vmatprep.subr.mxu0 0.0
      %123 = vmatpush1.msra.mxu0 %v101
      %124 = vmatprep.subr.mxu0 0.0
      %125 = vmatpush1.msra.mxu0 %v102
      %126 = vmatprep.subr.mxu0 0.0
      %127 = vmatpush1.msra.mxu0 %v103
      %128 = vmatprep.subr.mxu0 0.0
      %129 = vmatpush1.msra.mxu0 %v104
      %130 = vmatprep.subr.mxu0 0.0
      %131 = vmatpush1.msra.mxu0 %v105
      %132 = vmatprep.subr.mxu0 0.0
      %133 = vmatpush1.msra.mxu0 %v106
      %134 = vmatprep.subr.mxu0 0.0
      %135 = vmatpush1.msra.mxu0 %v107
      %136 = vmatprep.subr.mxu0 0.0
      %137 = vmatpush1.msra.mxu0 %v108
      %138 = vmatprep.subr.mxu0 0.0
      %139 = vmatpush1.msra.mxu0 %v109
      %140 = vmatprep.subr.mxu0 0.0
      %141 = vmatpush1.msra.mxu0 %v110
      %142 = vmatprep.subr.mxu0 0.0
      %143 = vmatpush1.msra.mxu0 %v111
      %144 = vmatprep.subr.mxu0 0.0
      %145 = vmatpush1.msra.mxu0 0.0
      %146 = vmatprep.subr.mxu0 0.0
      %147 = vmatpush1.msra.mxu0 0.0
      %148 = vmatprep.subr.mxu0 0.0
      %149 = vmatpush1.msra.mxu0 0.0
      %150 = vmatprep.subr.mxu0 0.0
      %151 = vmatpush1.msra.mxu0 0.0
      %152 = vmatprep.subr.mxu0 0.0
      %153 = vmatpush1.msra.mxu0 0.0
      %154 = vmatprep.subr.mxu0 0.0
      %155 = vmatpush1.msra.mxu0 0.0
      %156 = vmatprep.subr.mxu0 0.0
      %157 = vmatpush1.msra.mxu0 0.0
      %158 = vmatprep.subr.mxu0 0.0
      %159 = vmatpush1.msra.mxu0 0.0
      %160 = vmatprep.subr.mxu0 0.0
      %161 = vmatpush1.msra.mxu0 0.0
      %162 = vmatprep.subr.mxu0 0.0
      %163 = vmatpush1.msra.mxu0 0.0
      %164 = vmatprep.subr.mxu0 0.0
      %165 = vmatpush1.msra.mxu0 0.0
      %166 = vmatprep.subr.mxu0 0.0
      %167 = vmatpush1.msra.mxu0 0.0
      %168 = vmatprep.subr.mxu0 0.0
      %169 = vmatpush1.msra.mxu0 0.0
      %170 = vmatprep.subr.mxu0 0.0
      %171 = vmatpush1.msra.mxu0 0.0
      %172 = vmatprep.subr.mxu0 0.0
      %173 = vmatpush1.msra.mxu0 0.0
      %174 = vmatprep.subr.mxu0 0.0
      %175 = vmatpush1.msra.mxu0 0.0
      %176 = vmatprep.mubr.f32.mxu0 0.0
      %177 = vmatmul.mubr.f32.gmra.mrb[0].mxu0 %v64
      %v178 = vpop.f32.mrb[0].mxu0
      %v179 = vadd.f32 0.0, %v178
      %v180 = vpop.f32.mrb[0].mxu0
      %181 = vmatprep.mubr.f32.mxu0 0.0
      %182 = vmatmul.mubr.f32.gmra.mrb[0].mxu0 %v65
      %v183 = vpop.f32.mrb[0].mxu0
      %v184 = vadd.f32 0.0, %v183
      %v185 = vpop.f32.mrb[0].mxu0
      %186 = vmatprep.mubr.f32.mxu0 0.0
      %187 = vmatmul.mubr.f32.gmra.mrb[0].mxu0 %v66
      %v188 = vpop.f32.mrb[0].mxu0
      %v189 = vadd.f32 0.0, %v188
      %v190 = vpop.f32.mrb[0].mxu0
      %191 = vmatprep.mubr.f32.mxu0 0.0
      %192 = vmatmul.mubr.f32.gmra.mrb[0].mxu0 %v67
      %v193 = vpop.f32.mrb[0].mxu0
      %v194 = vadd.f32 0.0, %v193
      %v195 = vpop.f32.mrb[0].mxu0
      %196 = vmatprep.mubr.f32.mxu0 0.0
      %197 = vmatmul.mubr.f32.gmra.mrb[0].mxu0 %v68
      %v198 = vpop.f32.mrb[0].mxu0
      %v199 = vadd.f32 0.0, %v198
      %v200 = vpop.f32.mrb[0].mxu0
      %201 = vmatprep.mubr.f32.mxu0 0.0
      %202 = vmatmul.mubr.f32.gmra.mrb[0].mxu0 %v69
      %v203 = vpop.f32.mrb[0].mxu0
      %v204 = vadd.f32 0.0, %v203
      %v205 = vpop.f32.mrb[0].mxu0
      %206 = vmatprep.mubr.f32.mxu0 0.0
      %207 = vmatmul.mubr.f32.gmra.mrb[0].mxu0 %v70
      %v208 = vpop.f32.mrb[0].mxu0
      %v209 = vadd.f32 0.0, %v208
      %v210 = vpop.f32.mrb[0].mxu0
      %211 = vmatprep.mubr.f32.mxu0 0.0
      %212 = vmatmul.mubr.f32.gmra.mrb[0].mxu0 %v71
      %v213 = vpop.f32.mrb[0].mxu0
      %v214 = vadd.f32 0.0, %v213
      %v215 = vpop.f32.mrb[0].mxu0
      %216 = vmatprep.mubr.f32.mxu0 0.0
      %217 = vmatmul.mubr.f32.gmra.mrb[0].mxu0 %v72
      %v218 = vpop.f32.mrb[0].mxu0
      %v219 = vadd.f32 0.0, %v218
      %v220 = vpop.f32.mrb[0].mxu0
      %221 = vmatprep.mubr.f32.mxu0 0.0
      %222 = vmatmul.mubr.f32.gmra.mrb[0].mxu0 %v73
      %v223 = vpop.f32.mrb[0].mxu0
      %v224 = vadd.f32 0.0, %v223
      %v225 = vpop.f32.mrb[0].mxu0
      %226 = vmatprep.mubr.f32.mxu0 0.0
      %227 = vmatmul.mubr.f32.gmra.mrb[0].mxu0 %v74
      %v228 = vpop.f32.mrb[0].mxu0
      %v229 = vadd.f32 0.0, %v228
      %v230 = vpop.f32.mrb[0].mxu0
      %231 = vmatprep.mubr.f32.mxu0 0.0
      %232 = vmatmul.mubr.f32.gmra.mrb[0].mxu0 %v75
      %v233 = vpop.f32.mrb[0].mxu0
      %v234 = vadd.f32 0.0, %v233
      %v235 = vpop.f32.mrb[0].mxu0
      %236 = vmatprep.mubr.f32.mxu0 0.0
      %237 = vmatmul.mubr.f32.gmra.mrb[0].mxu0 %v76
      %v238 = vpop.f32.mrb[0].mxu0
      %v239 = vadd.f32 0.0, %v238
      %v240 = vpop.f32.mrb[0].mxu0
      %241 = vmatprep.mubr.f32.mxu0 0.0
      %242 = vmatmul.mubr.f32.gmra.mrb[0].mxu0 %v77
      %v243 = vpop.f32.mrb[0].mxu0
      %v244 = vadd.f32 0.0, %v243
      %v245 = vpop.f32.mrb[0].mxu0
      %246 = vmatprep.mubr.f32.mxu0 0.0
      %247 = vmatmul.mubr.f32.gmra.mrb[0].mxu0 %v78
      %v248 = vpop.f32.mrb[0].mxu0
      %v249 = vadd.f32 0.0, %v248
      %v250 = vpop.f32.mrb[0].mxu0
      %251 = vmatprep.mubr.f32.mxu0 0.0
      %252 = vmatmul.mubr.f32.gmra.mrb[0].mxu0 %v79
      %v253 = vpop.f32.mrb[0].mxu0
      %v254 = vadd.f32 0.0, %v253
      %v255 = vpop.f32.mrb[0].mxu0
      %256 = vmatprep.mubr.f32.mxu0 0.0
      %257 = vmatmul.mubr.f32.gmra.mrb[0].mxu0 %v80
      %v258 = vpop.f32.mrb[0].mxu0
      %v259 = vadd.f32 0.0, %v258
      %v260 = vpop.f32.mrb[0].mxu0
      %261 = vmatprep.mubr.f32.mxu0 0.0
      %262 = vmatmul.mubr.f32.gmra.mrb[0].mxu0 %v81
      %v263 = vpop.f32.mrb[0].mxu0
      %v264 = vadd.f32 0.0, %v263
      %v265 = vpop.f32.mrb[0].mxu0
      %266 = vmatprep.mubr.f32.mxu0 0.0
      %267 = vmatmul.mubr.f32.gmra.mrb[0].mxu0 %v82
      %v268 = vpop.f32.mrb[0].mxu0
      %v269 = vadd.f32 0.0, %v268
      %v270 = vpop.f32.mrb[0].mxu0
      %271 = vmatprep.mubr.f32.mxu0 0.0
      %272 = vmatmul.mubr.f32.gmra.mrb[0].mxu0 %v83
      %v273 = vpop.f32.mrb[0].mxu0
      %v274 = vadd.f32 0.0, %v273
      %v275 = vpop.f32.mrb[0].mxu0
      %276 = vmatprep.mubr.f32.mxu0 0.0
      %277 = vmatmul.mubr.f32.gmra.mrb[0].mxu0 %v84
      %v278 = vpop.f32.mrb[0].mxu0
      %v279 = vadd.f32 0.0, %v278
      %v280 = vpop.f32.mrb[0].mxu0
      %281 = vmatprep.mubr.f32.mxu0 0.0
      %282 = vmatmul.mubr.f32.gmra.mrb[0].mxu0 %v85
      %v283 = vpop.f32.mrb[0].mxu0
      %v284 = vadd.f32 0.0, %v283
      %v285 = vpop.f32.mrb[0].mxu0
      %286 = vmatprep.mubr.f32.mxu0 0.0
      %287 = vmatmul.mubr.f32.gmra.mrb[0].mxu0 %v86
      %v288 = vpop.f32.mrb[0].mxu0
      %v289 = vadd.f32 0.0, %v288
      %v290 = vpop.f32.mrb[0].mxu0
      %291 = vmatprep.mubr.f32.mxu0 0.0
      %292 = vmatmul.mubr.f32.gmra.mrb[0].mxu0 %v87
      %v293 = vpop.f32.mrb[0].mxu0
      %v294 = vadd.f32 0.0, %v293
      %v295 = vpop.f32.mrb[0].mxu0
      %296 = vmatprep.mubr.f32.mxu0 0.0
      %297 = vmatmul.mubr.f32.gmra.mrb[0].mxu0 %v88
      %v298 = vpop.f32.mrb[0].mxu0
      %v299 = vadd.f32 0.0, %v298
      %v300 = vpop.f32.mrb[0].mxu0
      %301 = vmatprep.mubr.f32.mxu0 0.0
      %302 = vmatmul.mubr.f32.gmra.mrb[0].mxu0 %v89
      %v303 = vpop.f32.mrb[0].mxu0
      %v304 = vadd.f32 0.0, %v303
      %v305 = vpop.f32.mrb[0].mxu0
      %306 = vmatprep.mubr.f32.mxu0 0.0
      %307 = vmatmul.mubr.f32.gmra.mrb[0].mxu0 %v90
      %v308 = vpop.f32.mrb[0].mxu0
      %v309 = vadd.f32 0.0, %v308
      %v310 = vpop.f32.mrb[0].mxu0
      %311 = vmatprep.mubr.f32.mxu0 0.0
      %312 = vmatmul.mubr.f32.gmra.mrb[0].mxu0 %v91
      %v313 = vpop.f32.mrb[0].mxu0
      %v314 = vadd.f32 0.0, %v313
      %v315 = vpop.f32.mrb[0].mxu0
      %316 = vmatprep.mubr.f32.mxu0 0.0
      %317 = vmatmul.mubr.f32.gmra.mrb[0].mxu0 %v92
      %v318 = vpop.f32.mrb[0].mxu0
      %v319 = vadd.f32 0.0, %v318
      %v320 = vpop.f32.mrb[0].mxu0
      %321 = vmatprep.mubr.f32.mxu0 0.0
      %322 = vmatmul.mubr.f32.gmra.mrb[0].mxu0 %v93
      %v323 = vpop.f32.mrb[0].mxu0
      %v324 = vadd.f32 0.0, %v323
      %v325 = vpop.f32.mrb[0].mxu0
      %326 = vmatprep.mubr.f32.mxu0 0.0
      %327 = vmatmul.mubr.f32.gmra.mrb[0].mxu0 %v94
      %v328 = vpop.f32.mrb[0].mxu0
      %v329 = vadd.f32 0.0, %v328
      %v330 = vpop.f32.mrb[0].mxu0
      %331 = vmatprep.mubr.f32.mxu0 0.0
      %332 = vmatmul.mubr.f32.gmra.mrb[0].mxu0 %v95
      %v333 = vpop.f32.mrb[0].mxu0
      %v334 = vadd.f32 0.0, %v333
      %v335 = vpop.f32.mrb[0].mxu0
      %336 = vdwg.mxu0
      %v337 = vpack.c.bf16 %v184, %v179
      %v338 = vpack.c.bf16 %v194, %v189
      %v339 = vpack.c.bf16 %v204, %v199
      %v340 = vpack.c.bf16 %v214, %v209
      %v341 = vpack.c.bf16 %v224, %v219
      %v342 = vpack.c.bf16 %v234, %v229
      %v343 = vpack.c.bf16 %v244, %v239
      %v344 = vpack.c.bf16 %v254, %v249
      %v345 = vpack.c.bf16 %v264, %v259
      %v346 = vpack.c.bf16 %v274, %v269
      %v347 = vpack.c.bf16 %v284, %v279
      %v348 = vpack.c.bf16 %v294, %v289
      %v349 = vpack.c.bf16 %v304, %v299
      %v350 = vpack.c.bf16 %v314, %v309
      %v351 = vpack.c.bf16 %v324, %v319
      %v352 = vpack.c.bf16 %v334, %v329
      %353 = vst [vmem:[#allocation2] sm:$0xff] %v337
      %354 = vst [vmem:[#allocation2 + $0x8] sm:$0xff] %v338
      %355 = vst [vmem:[#allocation2 + $0x10] sm:$0xff] %v339
      %356 = vst [vmem:[#allocation2 + $0x18] sm:$0xff] %v340
      %357 = vst [vmem:[#allocation2 + $0x20] sm:$0xff] %v341
      %358 = vst [vmem:[#allocation2 + $0x28] sm:$0xff] %v342
      %359 = vst [vmem:[#allocation2 + $0x30] sm:$0xff] %v343
      %360 = vst [vmem:[#allocation2 + $0x38] sm:$0xff] %v344
      %361 = vst [vmem:[#allocation2 + $0x40] sm:$0xff] %v345
      %362 = vst [vmem:[#allocation2 + $0x48] sm:$0xff] %v346
      %363 = vst [vmem:[#allocation2 + $0x50] sm:$0xff] %v347
      %364 = vst [vmem:[#allocation2 + $0x58] sm:$0xff] %v348
      %365 = vst [vmem:[#allocation2 + $0x60] sm:$0xff] %v349
      %366 = vst [vmem:[#allocation2 + $0x68] sm:$0xff] %v350
      %367 = vst [vmem:[#allocation2 + $0x70] sm:$0xff] %v351
      %368 = vst [vmem:[#allocation2 + $0x78] sm:$0xff] %v352
    $region33: #{tpu_custom_call.1} parent=1 // pred_fallthru
      _
    %v369 = vld [vmem:[#allocation8] sm:$0xff]
    %v370 = vld [vmem:[#allocation8 + $0x8] sm:$0xff]
    %v371 = vld [vmem:[#allocation8 + $0x10] sm:$0xff]
    %v372 = vld [vmem:[#allocation8 + $0x18] sm:$0xff]
    %v373 = vld [vmem:[#allocation8 + $0x20] sm:$0xff]
    %v374 = vld [vmem:[#allocation8 + $0x28] sm:$0xff]
    %v375 = vld [vmem:[#allocation8 + $0x30] sm:$0xff]
    %v376 = vld [vmem:[#allocation8 + $0x38] sm:$0xff]
    %v377 = vld [vmem:[#allocation8 + $0x40] sm:$0xff]
    %v378 = vld [vmem:[#allocation8 + $0x48] sm:$0xff]
    %v379 = vld [vmem:[#allocation8 + $0x50] sm:$0xff]
    %v380 = vld [vmem:[#allocation8 + $0x58] sm:$0xff]
    %v381 = vld [vmem:[#allocation8 + $0x60] sm:$0xff]
    %v382 = vld [vmem:[#allocation8 + $0x68] sm:$0xff]
    %v383 = vld [vmem:[#allocation8 + $0x70] sm:$0xff]
    %v384 = vld [vmem:[#allocation8 + $0x78] sm:$0xff]
    %v385 = vld [vmem:[#allocation8 + $0x80] sm:$0xff]
    %v386 = vld [vmem:[#allocation8 + $0x88] sm:$0xff]
    %v387 = vld [vmem:[#allocation8 + $0x90] sm:$0xff]
    %v388 = vld [vmem:[#allocation8 + $0x98] sm:$0xff]
    %v389 = vld [vmem:[#allocation8 + $0xa0] sm:$0xff]
    %v390 = vld [vmem:[#allocation8 + $0xa8] sm:$0xff]
    %v391 = vld [vmem:[#allocation8 + $0xb0] sm:$0xff]
    %v392 = vld [vmem:[#allocation8 + $0xb8] sm:$0xff]
    %v393 = vld [vmem:[#allocation8 + $0xc0] sm:$0xff]
    %v394 = vld [vmem:[#allocation8 + $0xc8] sm:$0xff]
    %v395 = vld [vmem:[#allocation8 + $0xd0] sm:$0xff]
    %v396 = vld [vmem:[#allocation8 + $0xd8] sm:$0xff]
    %v397 = vld [vmem:[#allocation8 + $0xe0] sm:$0xff]
    %v398 = vld [vmem:[#allocation8 + $0xe8] sm:$0xff]
    %v399 = vld [vmem:[#allocation8 + $0xf0] sm:$0xff]
    %v400 = vld [vmem:[#allocation8 + $0xf8] sm:$0xff]
    %v401 = vld [vmem:[#allocation2] sm:$0xff]
    %v402 = vld [vmem:[#allocation2 + $0x8] sm:$0xff]
    %v403 = vld [vmem:[#allocation2 + $0x10] sm:$0xff]
    %v404 = vld [vmem:[#allocation2 + $0x18] sm:$0xff]
    %v405 = vld [vmem:[#allocation2 + $0x20] sm:$0xff]
    %v406 = vld [vmem:[#allocation2 + $0x28] sm:$0xff]
    %v407 = vld [vmem:[#allocation2 + $0x30] sm:$0xff]
    %v408 = vld [vmem:[#allocation2 + $0x38] sm:$0xff]
    %v409 = vld [vmem:[#allocation2 + $0x40] sm:$0xff]
    %v410 = vld [vmem:[#allocation2 + $0x48] sm:$0xff]
    %v411 = vld [vmem:[#allocation2 + $0x50] sm:$0xff]
    %v412 = vld [vmem:[#allocation2 + $0x58] sm:$0xff]
    %v413 = vld [vmem:[#allocation2 + $0x60] sm:$0xff]
    %v414 = vld [vmem:[#allocation2 + $0x68] sm:$0xff]
    %v415 = vld [vmem:[#allocation2 + $0x70] sm:$0xff]
    %v416 = vld [vmem:[#allocation2 + $0x78] sm:$0xff]
    %v417 = vld [vmem:[%s3] sm:$0x1]
    %v419 = vlaneseq
    %v420 = vshrl.u32 %v419, 7
    %v421 = vsub.s32 0, %v420
    %v422 = vrot.slane %v417, %v421
    %v456 = vunpack.c.l.b16 %v369
    %v457 = vunpack.c.h.b16 %v369
    %v458 = vunpack.c.l.b16 %v370
    %v459 = vunpack.c.h.b16 %v370
    %v460 = vunpack.c.l.b16 %v371
    %v461 = vunpack.c.h.b16 %v371
    %v462 = vunpack.c.l.b16 %v372
    %v463 = vunpack.c.h.b16 %v372
    %v464 = vunpack.c.l.b16 %v373
    %v465 = vunpack.c.h.b16 %v373
    %v466 = vunpack.c.l.b16 %v374
    %v467 = vunpack.c.h.b16 %v374
    %v468 = vunpack.c.l.b16 %v375
    %v469 = vunpack.c.h.b16 %v375
    %v470 = vunpack.c.l.b16 %v376
    %v471 = vunpack.c.h.b16 %v376
    %v472 = vunpack.c.l.b16 %v377
    %v473 = vunpack.c.h.b16 %v377
    %v474 = vunpack.c.l.b16 %v378
    %v475 = vunpack.c.h.b16 %v378
    %v476 = vunpack.c.l.b16 %v379
    %v477 = vunpack.c.h.b16 %v379
    %v478 = vunpack.c.l.b16 %v380
    %v479 = vunpack.c.h.b16 %v380
    %v480 = vunpack.c.l.b16 %v381
    %v481 = vunpack.c.h.b16 %v381
    %v482 = vunpack.c.l.b16 %v382
    %v483 = vunpack.c.h.b16 %v382
    %v484 = vunpack.c.l.b16 %v383
    %v485 = vunpack.c.h.b16 %v383
    %v486 = vunpack.c.l.b16 %v384
    %v487 = vunpack.c.h.b16 %v384
    %v488 = vunpack.c.l.b16 %v385
    %v489 = vunpack.c.h.b16 %v385
    %v490 = vunpack.c.l.b16 %v386
    %v491 = vunpack.c.h.b16 %v386
    %v492 = vunpack.c.l.b16 %v387
    %v493 = vunpack.c.h.b16 %v387
    %v494 = vunpack.c.l.b16 %v388
    %v495 = vunpack.c.h.b16 %v388
    %v496 = vunpack.c.l.b16 %v389
    %v497 = vunpack.c.h.b16 %v389
    %v498 = vunpack.c.l.b16 %v390
    %v499 = vunpack.c.h.b16 %v390
    %v500 = vunpack.c.l.b16 %v391
    %v501 = vunpack.c.h.b16 %v391
    %v502 = vunpack.c.l.b16 %v392
    %v503 = vunpack.c.h.b16 %v392
    %v504 = vunpack.c.l.b16 %v393
    %v505 = vunpack.c.h.b16 %v393
    %v506 = vunpack.c.l.b16 %v394
    %v507 = vunpack.c.h.b16 %v394
    %v508 = vunpack.c.l.b16 %v395
    %v509 = vunpack.c.h.b16 %v395
    %v510 = vunpack.c.l.b16 %v396
    %v511 = vunpack.c.h.b16 %v396
    %v512 = vunpack.c.l.b16 %v397
    %v513 = vunpack.c.h.b16 %v397
    %v514 = vunpack.c.l.b16 %v398
    %v515 = vunpack.c.h.b16 %v398
    %v516 = vunpack.c.l.b16 %v399
    %v517 = vunpack.c.h.b16 %v399
    %v518 = vunpack.c.l.b16 %v400
    %v519 = vunpack.c.h.b16 %v400
    %v520 = vpack.c.b16 %v458, %v456
    %v521 = vpack.c.b16 %v459, %v457
    %v522 = vpack.c.b16 %v462, %v460
    %v523 = vpack.c.b16 %v463, %v461
    %v524 = vpack.c.b16 %v466, %v464
    %v525 = vpack.c.b16 %v467, %v465
    %v526 = vpack.c.b16 %v470, %v468
    %v527 = vpack.c.b16 %v471, %v469
    %v528 = vpack.c.b16 %v474, %v472
    %v529 = vpack.c.b16 %v475, %v473
    %v530 = vpack.c.b16 %v478, %v476
    %v531 = vpack.c.b16 %v479, %v477
    %v532 = vpack.c.b16 %v482, %v480
    %v533 = vpack.c.b16 %v483, %v481
    %v534 = vpack.c.b16 %v486, %v484
    %v535 = vpack.c.b16 %v487, %v485
    %v536 = vpack.c.b16 %v490, %v488
    %v537 = vpack.c.b16 %v491, %v489
    %v538 = vpack.c.b16 %v494, %v492
    %v539 = vpack.c.b16 %v495, %v493
    %v540 = vpack.c.b16 %v498, %v496
    %v541 = vpack.c.b16 %v499, %v497
    %v542 = vpack.c.b16 %v502, %v500
    %v543 = vpack.c.b16 %v503, %v501
    %v544 = vpack.c.b16 %v506, %v504
    %v545 = vpack.c.b16 %v507, %v505
    %v546 = vpack.c.b16 %v510, %v508
    %v547 = vpack.c.b16 %v511, %v509
    %v548 = vpack.c.b16 %v514, %v512
    %v549 = vpack.c.b16 %v515, %v513
    %v550 = vpack.c.b16 %v518, %v516
    %v551 = vpack.c.b16 %v519, %v517
    %584 = vmatprep.subr.bf16.mxu0 0
    %585 = vmatpush1.bf16.msra.mxu0 %v401
    %586 = vmatprep.subr.bf16.mxu0 0
    %587 = vmatpush1.bf16.msra.mxu0 %v402
    %588 = vmatprep.subr.bf16.mxu0 0
    %589 = vmatpush1.bf16.msra.mxu0 %v403
    %590 = vmatprep.subr.bf16.mxu0 0
    %591 = vmatpush1.bf16.msra.mxu0 %v404
    %592 = vmatprep.subr.bf16.mxu0 0
    %593 = vmatpush1.bf16.msra.mxu0 %v405
    %594 = vmatprep.subr.bf16.mxu0 0
    %595 = vmatpush1.bf16.msra.mxu0 %v406
    %596 = vmatprep.subr.bf16.mxu0 0
    %597 = vmatpush1.bf16.msra.mxu0 %v407
    %598 = vmatprep.subr.bf16.mxu0 0
    %599 = vmatpush1.bf16.msra.mxu0 %v408
    %600 = vmatprep.subr.bf16.mxu0 0
    %601 = vmatpush1.bf16.msra.mxu0 %v409
    %602 = vmatprep.subr.bf16.mxu0 0
    %603 = vmatpush1.bf16.msra.mxu0 %v410
    %604 = vmatprep.subr.bf16.mxu0 0
    %605 = vmatpush1.bf16.msra.mxu0 %v411
    %606 = vmatprep.subr.bf16.mxu0 0
    %607 = vmatpush1.bf16.msra.mxu0 %v412
    %608 = vmatprep.subr.bf16.mxu0 0
    %609 = vmatpush1.bf16.msra.mxu0 %v413
    %610 = vmatprep.subr.bf16.mxu0 0
    %611 = vmatpush1.bf16.msra.mxu0 %v414
    %612 = vmatprep.subr.bf16.mxu0 0
    %613 = vmatpush1.bf16.msra.mxu0 %v415
    %614 = vmatprep.subr.bf16.mxu0 0
    %615 = vmatpush1.bf16.msra.mxu0 %v416
    %616 = vmatprep.mubr.bf16.mxu0 %v521
    %617 = vmatmul.mubr.bf16.gmra.mrb[0].mxu0 %v520
    %v618 = vpop.f32.mrb[0].mxu0
    %v619 = vadd.f32 %v422, %v618
    %v620 = vpop.f32.mrb[0].mxu0
    %v621 = vpop.f32.mrb[0].mxu0
    %v622 = vadd.f32 %v422, %v621
    %v623 = vpop.f32.mrb[0].mxu0
    %624 = vmatprep.mubr.bf16.mxu0 %v523
    %625 = vmatmul.mubr.bf16.gmra.mrb[0].mxu0 %v522
    %v626 = vpop.f32.mrb[0].mxu0
    %v627 = vadd.f32 %v422, %v626
    %v628 = vpop.f32.mrb[0].mxu0
    %v629 = vpop.f32.mrb[0].mxu0
    %v630 = vadd.f32 %v422, %v629
    %v631 = vpop.f32.mrb[0].mxu0
    %632 = vmatprep.mubr.bf16.mxu0 %v525
    %633 = vmatmul.mubr.bf16.gmra.mrb[0].mxu0 %v524
    %v634 = vpop.f32.mrb[0].mxu0
    %v635 = vadd.f32 %v422, %v634
    %v636 = vpop.f32.mrb[0].mxu0
    %v637 = vpop.f32.mrb[0].mxu0
    %v638 = vadd.f32 %v422, %v637
    %v639 = vpop.f32.mrb[0].mxu0
    %640 = vmatprep.mubr.bf16.mxu0 %v527
    %641 = vmatmul.mubr.bf16.gmra.mrb[0].mxu0 %v526
    %v642 = vpop.f32.mrb[0].mxu0
    %v643 = vadd.f32 %v422, %v642
    %v644 = vpop.f32.mrb[0].mxu0
    %v645 = vpop.f32.mrb[0].mxu0
    %v646 = vadd.f32 %v422, %v645
    %v647 = vpop.f32.mrb[0].mxu0
    %648 = vmatprep.mubr.bf16.mxu0 %v529
    %649 = vmatmul.mubr.bf16.gmra.mrb[0].mxu0 %v528
    %v650 = vpop.f32.mrb[0].mxu0
    %v651 = vadd.f32 %v422, %v650
    %v652 = vpop.f32.mrb[0].mxu0
    %v653 = vpop.f32.mrb[0].mxu0
    %v654 = vadd.f32 %v422, %v653
    %v655 = vpop.f32.mrb[0].mxu0
    %656 = vmatprep.mubr.bf16.mxu0 %v531
    %657 = vmatmul.mubr.bf16.gmra.mrb[0].mxu0 %v530
    %v658 = vpop.f32.mrb[0].mxu0
    %v659 = vadd.f32 %v422, %v658
    %v660 = vpop.f32.mrb[0].mxu0
    %v661 = vpop.f32.mrb[0].mxu0
    %v662 = vadd.f32 %v422, %v661
    %v663 = vpop.f32.mrb[0].mxu0
    %664 = vmatprep.mubr.bf16.mxu0 %v533
    %665 = vmatmul.mubr.bf16.gmra.mrb[0].mxu0 %v532
    %v666 = vpop.f32.mrb[0].mxu0
    %v667 = vadd.f32 %v422, %v666
    %v668 = vpop.f32.mrb[0].mxu0
    %v669 = vpop.f32.mrb[0].mxu0
    %v670 = vadd.f32 %v422, %v669
    %v671 = vpop.f32.mrb[0].mxu0
    %672 = vmatprep.mubr.bf16.mxu0 %v535
    %673 = vmatmul.mubr.bf16.gmra.mrb[0].mxu0 %v534
    %v674 = vpop.f32.mrb[0].mxu0
    %v675 = vadd.f32 %v422, %v674
    %v676 = vpop.f32.mrb[0].mxu0
    %v677 = vpop.f32.mrb[0].mxu0
    %v678 = vadd.f32 %v422, %v677
    %v679 = vpop.f32.mrb[0].mxu0
    %680 = vmatprep.mubr.bf16.mxu0 %v537
    %681 = vmatmul.mubr.bf16.gmra.mrb[0].mxu0 %v536
    %v682 = vpop.f32.mrb[0].mxu0
    %v683 = vadd.f32 %v422, %v682
    %v684 = vpop.f32.mrb[0].mxu0
    %v685 = vpop.f32.mrb[0].mxu0
    %v686 = vadd.f32 %v422, %v685
    %v687 = vpop.f32.mrb[0].mxu0
    %688 = vmatprep.mubr.bf16.mxu0 %v539
    %689 = vmatmul.mubr.bf16.gmra.mrb[0].mxu0 %v538
    %v690 = vpop.f32.mrb[0].mxu0
    %v691 = vadd.f32 %v422, %v690
    %v692 = vpop.f32.mrb[0].mxu0
    %v693 = vpop.f32.mrb[0].mxu0
    %v694 = vadd.f32 %v422, %v693
    %v695 = vpop.f32.mrb[0].mxu0
    %696 = vmatprep.mubr.bf16.mxu0 %v541
    %697 = vmatmul.mubr.bf16.gmra.mrb[0].mxu0 %v540
    %v698 = vpop.f32.mrb[0].mxu0
    %v699 = vadd.f32 %v422, %v698
    %v700 = vpop.f32.mrb[0].mxu0
    %v701 = vpop.f32.mrb[0].mxu0
    %v702 = vadd.f32 %v422, %v701
    %v703 = vpop.f32.mrb[0].mxu0
    %704 = vmatprep.mubr.bf16.mxu0 %v543
    %705 = vmatmul.mubr.bf16.gmra.mrb[0].mxu0 %v542
    %v706 = vpop.f32.mrb[0].mxu0
    %v707 = vadd.f32 %v422, %v706
    %v708 = vpop.f32.mrb[0].mxu0
    %v709 = vpop.f32.mrb[0].mxu0
    %v710 = vadd.f32 %v422, %v709
    %v711 = vpop.f32.mrb[0].mxu0
    %712 = vmatprep.mubr.bf16.mxu0 %v545
    %713 = vmatmul.mubr.bf16.gmra.mrb[0].mxu0 %v544
    %v714 = vpop.f32.mrb[0].mxu0
    %v715 = vadd.f32 %v422, %v714
    %v716 = vpop.f32.mrb[0].mxu0
    %v717 = vpop.f32.mrb[0].mxu0
    %v718 = vadd.f32 %v422, %v717
    %v719 = vpop.f32.mrb[0].mxu0
    %720 = vmatprep.mubr.bf16.mxu0 %v547
    %721 = vmatmul.mubr.bf16.gmra.mrb[0].mxu0 %v546
    %v722 = vpop.f32.mrb[0].mxu0
    %v723 = vadd.f32 %v422, %v722
    %v724 = vpop.f32.mrb[0].mxu0
    %v725 = vpop.f32.mrb[0].mxu0
    %v726 = vadd.f32 %v422, %v725
    %v727 = vpop.f32.mrb[0].mxu0
    %728 = vmatprep.mubr.bf16.mxu0 %v549
    %729 = vmatmul.mubr.bf16.gmra.mrb[0].mxu0 %v548
    %v730 = vpop.f32.mrb[0].mxu0
    %v731 = vadd.f32 %v422, %v730
    %v732 = vpop.f32.mrb[0].mxu0
    %v733 = vpop.f32.mrb[0].mxu0
    %v734 = vadd.f32 %v422, %v733
    %v735 = vpop.f32.mrb[0].mxu0
    %736 = vmatprep.mubr.bf16.mxu0 %v551
    %737 = vmatmul.mubr.bf16.gmra.mrb[0].mxu0 %v550
    %v738 = vpop.f32.mrb[0].mxu0
    %v739 = vadd.f32 %v422, %v738
    %v740 = vpop.f32.mrb[0].mxu0
    %v741 = vpop.f32.mrb[0].mxu0
    %v742 = vadd.f32 %v422, %v741
    %v743 = vpop.f32.mrb[0].mxu0
    %744 = vdwg.mxu0
    %745 = vst [vmem:[#allocation9] sm:$0xff] %v619
    %746 = vst [vmem:[#allocation9 + $0x8] sm:$0xff] %v622
    %747 = vst [vmem:[#allocation9 + $0x10] sm:$0xff] %v627
    %748 = vst [vmem:[#allocation9 + $0x18] sm:$0xff] %v630
    %749 = vst [vmem:[#allocation9 + $0x20] sm:$0xff] %v635
    %750 = vst [vmem:[#allocation9 + $0x28] sm:$0xff] %v638
    %751 = vst [vmem:[#allocation9 + $0x30] sm:$0xff] %v643
    %752 = vst [vmem:[#allocation9 + $0x38] sm:$0xff] %v646
    %753 = vst [vmem:[#allocation9 + $0x40] sm:$0xff] %v651
    %754 = vst [vmem:[#allocation9 + $0x48] sm:$0xff] %v654
    %755 = vst [vmem:[#allocation9 + $0x50] sm:$0xff] %v659
    %756 = vst [vmem:[#allocation9 + $0x58] sm:$0xff] %v662
    %757 = vst [vmem:[#allocation9 + $0x60] sm:$0xff] %v667
    %758 = vst [vmem:[#allocation9 + $0x68] sm:$0xff] %v670
    %759 = vst [vmem:[#allocation9 + $0x70] sm:$0xff] %v675
    %760 = vst [vmem:[#allocation9 + $0x78] sm:$0xff] %v678
    %761 = vst [vmem:[#allocation9 + $0x80] sm:$0xff] %v683
    %762 = vst [vmem:[#allocation9 + $0x88] sm:$0xff] %v686
    %763 = vst [vmem:[#allocation9 + $0x90] sm:$0xff] %v691
    %764 = vst [vmem:[#allocation9 + $0x98] sm:$0xff] %v694
    %765 = vst [vmem:[#allocation9 + $0xa0] sm:$0xff] %v699
    %766 = vst [vmem:[#allocation9 + $0xa8] sm:$0xff] %v702
    %767 = vst [vmem:[#allocation9 + $0xb0] sm:$0xff] %v707
    %768 = vst [vmem:[#allocation9 + $0xb8] sm:$0xff] %v710
    %769 = vst [vmem:[#allocation9 + $0xc0] sm:$0xff] %v715
    %770 = vst [vmem:[#allocation9 + $0xc8] sm:$0xff] %v718
    %771 = vst [vmem:[#allocation9 + $0xd0] sm:$0xff] %v723
    %772 = vst [vmem:[#allocation9 + $0xd8] sm:$0xff] %v726
    %773 = vst [vmem:[#allocation9 + $0xe0] sm:$0xff] %v731
    %774 = vst [vmem:[#allocation9 + $0xe8] sm:$0xff] %v734
    %775 = vst [vmem:[#allocation9 + $0xf0] sm:$0xff] %v739
    %776 = vst [vmem:[#allocation9 + $0xf8] sm:$0xff] %v742
    // Predicated region
    $region34: #{tpu_custom_call.1} parent=1 // pred_check
      _
    $region35: #{tpu_custom_call.1} parent=1 // pred_check_branch
      %778 = sbr.rel (0) target = $region37
    $region36: #{tpu_custom_call.1} parent=1 // pred_region
      %s780 = ssub.s32 4096, 4096
      %781 = vsyncadd [#allocation5], %s780
      %s782 = sshll.u32 [#allocation9], 4
      %s783 = int_to_ptr.vmem [resolvable:$true] %s782
      %788 = dma.vmem_to_hbm [thread:$0]  %s783, 4096, %s4, [#allocation5], 128, 128, 8
    $region37: #{tpu_custom_call.1} parent=1 // pred_fallthru
      _
    // Predicated region
    $region38: #{tpu_custom_call.1} parent=1 // pred_check
      _
    $region39: #{tpu_custom_call.1} parent=1 // pred_check_branch
      %790 = sbr.rel (0) target = $region41
    $region40: #{tpu_custom_call.1} parent=1 // pred_region
      %791 = dma.done [#allocation5], 4096
    $region41: #{tpu_custom_call.1} parent=1 // pred_fallthru
      _
    %792 = vsyncpa [#allocation4], 1
    %793 = vsyncpa [#allocation7], 1
    %794 = vsyncpa [#allocation5], 1

</llo_original>
